<compile_context>
chip_gen: v5e
topology: v5e:2x2
jax: 0.10.0
libtpu: 0.0.40
codegen_flags: <defaults>
</compile_context>

<pallas_src>
import math
import jax
import jax.numpy as jnp
from jax.experimental import pallas as pl
from jax.experimental.pallas import tpu as pltpu


# ----------------------------------------------------------------------------
# Buffer setup (glue, plain JAX): sinusoidal pe exactly as PositionalEncoding
# builds it in __init__ -> shape (max_len, 1, d_model).
# ----------------------------------------------------------------------------
def make_pe(d_model: int, max_len: int = 5000) -> jnp.ndarray:
    position = jnp.arange(0, max_len, dtype=jnp.float32)[:, None]           # (L, 1)
    div_term = jnp.exp(
        jnp.arange(0, d_model, 2, dtype=jnp.float32) * (-math.log(10000.0) / d_model)
    )                                                                        # (D/2,)
    pe = jnp.zeros((max_len, d_model), dtype=jnp.float32)
    pe = pe.at[:, 0::2].set(jnp.sin(position * div_term))
    pe = pe.at[:, 1::2].set(jnp.cos(position * div_term))
    return pe[:, None, :]                                                    # (L, 1, D)


# ----------------------------------------------------------------------------
# Pallas kernel: time_embed MLP  (y = SiLU(x @ W1 + b1) @ W2 + b2)
#   x_ref  : (tile_b, D)
#   w*_ref : (D, D)   stored (in, out) so the kernel does x @ W
#   b*_ref : (1, D)
#   o_ref  : (tile_b, D)
# ----------------------------------------------------------------------------
def _time_embed_kernel(x_ref, w1_ref, b1_ref, w2_ref, b2_ref, o_ref):
    x = x_ref[...].astype(jnp.float32)
    h = jnp.dot(x, w1_ref[...].astype(jnp.float32),
                preferred_element_type=jnp.float32) + b1_ref[...].astype(jnp.float32)
    h = h * jax.nn.sigmoid(h)                       # SiLU
    y = jnp.dot(h, w2_ref[...].astype(jnp.float32),
                preferred_element_type=jnp.float32) + b2_ref[...].astype(jnp.float32)
    o_ref[...] = y.astype(o_ref.dtype)


# ----------------------------------------------------------------------------
# Wrapper
# ----------------------------------------------------------------------------
def timestep_embedder(timesteps, pe, w1, b1, w2, b2, *, tile_b=None, use_pallas=None):
    """TimestepEmbedder forward.

    timesteps: (B,) int32 indices into pe
    pe:        (max_len, 1, D)
    w1, w2:    (D, D) stored (in, out)  -> y = x @ w + b  (transpose of torch's (out,in))
    b1, b2:    (D,)
    returns:   (1, B, D)  == time_embed(pe[timesteps]).permute(1, 0, 2)
    """
    B = timesteps.shape[0]
    D = pe.shape[-1]

    # Data-dependent row gather done wrapper-side (see header note).
    x = jnp.take(pe[:, 0, :], timesteps, axis=0)    # (B, D)

    if use_pallas is None:
        # Don't pay pallas_call launch overhead for trivially small problems.
        use_pallas = B * D >= 8 * 128

    if not use_pallas:
        h = x @ w1 + b1
        h = h * jax.nn.sigmoid(h)
        return ((h @ w2 + b2)[None, :, :])

    # Batch tiling: full batch when small (block == full dim is always legal);
    # 512-row tiles (multiple of 8 sublanes) once B is large enough to benefit
    # from double-buffered pipelining.  Per-block VMEM stays far below the
    # scoped limits of v5e (16 MiB) and v7x (32 MiB) even for D = 1024.
    if tile_b is None:
        tile_b = 512 if B > 512 else B
    grid = (pl.cdiv(B, tile_b),)

    x_spec = pl.BlockSpec((tile_b, D), lambda i: (i, 0))
    w_spec = pl.BlockSpec((D, D), lambda i: (0, 0))     # resident across grid steps
    b_spec = pl.BlockSpec((1, D), lambda i: (0, 0))
    out_spec = pl.BlockSpec((tile_b, D), lambda i: (i, 0))

    out = pl.pallas_call(
        _time_embed_kernel,
        out_shape=jax.ShapeDtypeStruct((B, D), x.dtype),
        grid_spec=pltpu.PrefetchScalarGridSpec(
            num_scalar_prefetch=0,
            grid=grid,
            in_specs=[x_spec, w_spec, b_spec, w_spec, b_spec],
            out_specs=out_spec,
        ),
        compiler_params=pltpu.CompilerParams(
            dimension_semantics=("parallel",),          # megacore-shardable on v7x
        ),
    )(x, w1, b1.reshape(1, D), w2, b2.reshape(1, D))

    # pe[timesteps] is (B, 1, D); time_embed keeps that; .permute(1, 0, 2) -> (1, B, D)
    return out[None, :, :]


# ----------------------------------------------------------------------------
# Main
# ----------------------------------------------------------------------------
if __name__ == "__main__":
    LATENT_DIM = 128          # small demo size, but lane-dense (multiple of 128)
    MAX_LEN = 5000
    B = 8                     # batch of timesteps

    key = jax.random.PRNGKey(0)
    k1, k2, k3, k4, k5 = jax.random.split(key, 5)

    pe = make_pe(LATENT_DIM, MAX_LEN)

    scale = 1.0 / math.sqrt(LATENT_DIM)
    w1 = jax.random.uniform(k1, (LATENT_DIM, LATENT_DIM), jnp.float32, -scale, scale)
    b1 = jax.random.uniform(k2, (LATENT_DIM,), jnp.float32, -scale, scale)
    w2 = jax.random.uniform(k3, (LATENT_DIM, LATENT_DIM), jnp.float32, -scale, scale)
    b2 = jax.random.uniform(k4, (LATENT_DIM,), jnp.float32, -scale, scale)

    timesteps = jax.random.randint(k5, (B,), 0, MAX_LEN, dtype=jnp.int32)

    # Force the Pallas path so the kernel itself is exercised at demo size.
    out = jax.block_until_ready(
        timestep_embedder(timesteps, pe, w1, b1, w2, b2, use_pallas=True)
    )

    # Pure-JAX reference matching the PyTorch forward semantics.
    x_ref = pe[timesteps, 0, :]
    h_ref = x_ref @ w1 + b1
    h_ref = h_ref * jax.nn.sigmoid(h_ref)
    ref = (h_ref @ w2 + b2)[None, :, :]

    assert out.shape == (1, B, LATENT_DIM)
    assert jnp.allclose(out, ref, atol=1e-5, rtol=1e-5), "mismatch vs reference"

    print("KERNEL_OK")
</pallas_src>

<mosaic_0001>
module attributes {stable_mosaic.version = 11 : i64} {
  func.func @_time_embed_kernel(%arg0: i32, %arg1: memref<8x128xf32, #tpu.memory_space<vmem>>, %arg2: memref<128x128xf32, #tpu.memory_space<vmem>>, %arg3: memref<1x128xf32, #tpu.memory_space<vmem>>, %arg4: memref<128x128xf32, #tpu.memory_space<vmem>>, %arg5: memref<1x128xf32, #tpu.memory_space<vmem>>, %arg6: memref<8x128xf32, #tpu.memory_space<vmem>>) attributes {dimension_semantics = [#tpu.dimension_semantics<parallel>], iteration_bounds = array<i64: 1>, scalar_prefetch = 0 : i64, scratch_operands = 0 : i64, tpu.core_type = #tpu.core_type<tc>, window_params = [{transform_indices = @transform_0, window_bounds = array<i64: 8, 128>}, {pipeline_mode = #tpu.pipeline_mode<synchronous>, transform_indices = @transform_1, window_bounds = array<i64: 128, 128>}, {pipeline_mode = #tpu.pipeline_mode<synchronous>, transform_indices = @transform_2, window_bounds = array<i64: 1, 128>}, {pipeline_mode = #tpu.pipeline_mode<synchronous>, transform_indices = @transform_3, window_bounds = array<i64: 128, 128>}, {pipeline_mode = #tpu.pipeline_mode<synchronous>, transform_indices = @transform_4, window_bounds = array<i64: 1, 128>}, {transform_indices = @transform_5, window_bounds = array<i64: 8, 128>}]} {
    %c0 = arith.constant 0 : index
    %c0_0 = arith.constant 0 : index
    %0 = vector.load %arg1[%c0, %c0_0] : memref<8x128xf32, #tpu.memory_space<vmem>>, vector<8x128xf32>
    %c0_1 = arith.constant 0 : index
    %c0_2 = arith.constant 0 : index
    %1 = vector.load %arg2[%c0_1, %c0_2] : memref<128x128xf32, #tpu.memory_space<vmem>>, vector<128x128xf32>
    %cst = arith.constant dense<0.000000e+00> : vector<8x128xf32>
    %2 = tpu.matmul %0, %1, %cst {dimension_numbers = #tpu.dot_dimension_numbers<[1], [0], [0], [1], [0, 0, 1, 1], [], []>} : vector<8x128xf32>, vector<128x128xf32>, vector<8x128xf32> -> vector<8x128xf32>
    %c0_3 = arith.constant 0 : index
    %c0_4 = arith.constant 0 : index
    %3 = vector.load %arg3[%c0_3, %c0_4] : memref<1x128xf32, #tpu.memory_space<vmem>>, vector<1x128xf32>
    %4 = vector.broadcast %3 : vector<1x128xf32> to vector<8x128xf32>
    %5 = arith.addf %2, %4 : vector<8x128xf32>
    %6 = arith.negf %5 : vector<8x128xf32>
    %7 = math.exp %6 : vector<8x128xf32>
    %cst_5 = arith.constant 1.000000e+00 : f32
    %8 = vector.broadcast %cst_5 : f32 to vector<8x128xf32>
    %9 = arith.addf %8, %7 : vector<8x128xf32>
    %10 = arith.divf %8, %9 : vector<8x128xf32>
    %11 = arith.mulf %5, %10 : vector<8x128xf32>
    %c0_6 = arith.constant 0 : index
    %c0_7 = arith.constant 0 : index
    %12 = vector.load %arg4[%c0_6, %c0_7] : memref<128x128xf32, #tpu.memory_space<vmem>>, vector<128x128xf32>
    %cst_8 = arith.constant dense<0.000000e+00> : vector<8x128xf32>
    %13 = tpu.matmul %11, %12, %cst_8 {dimension_numbers = #tpu.dot_dimension_numbers<[1], [0], [0], [1], [0, 0, 1, 1], [], []>} : vector<8x128xf32>, vector<128x128xf32>, vector<8x128xf32> -> vector<8x128xf32>
    %c0_9 = arith.constant 0 : index
    %c0_10 = arith.constant 0 : index
    %14 = vector.load %arg5[%c0_9, %c0_10] : memref<1x128xf32, #tpu.memory_space<vmem>>, vector<1x128xf32>
    %15 = vector.broadcast %14 : vector<1x128xf32> to vector<8x128xf32>
    %16 = arith.addf %13, %15 : vector<8x128xf32>
    %c0_11 = arith.constant 0 : index
    %c0_12 = arith.constant 0 : index
    %17 = vector.load %arg6[%c0_11, %c0_12] : memref<8x128xf32, #tpu.memory_space<vmem>>, vector<8x128xf32>
    tpu.vector_store %arg6[%c0_11, %c0_12], %16 {strides = array<i32>} : memref<8x128xf32, #tpu.memory_space<vmem>>, vector<8x128xf32>,
    return
  }
  func.func @transform_0(%arg0: i32) -> (i32, i32) {
    %c0_i32 = arith.constant 0 : i32
    %c0_i32_0 = arith.constant 0 : i32
    return %arg0, %c0_i32 : i32, i32
  }
  func.func @transform_1(%arg0: i32) -> (i32, i32) {
    %c0_i32 = arith.constant 0 : i32
    %c0_i32_0 = arith.constant 0 : i32
    %c0_i32_1 = arith.constant 0 : i32
    return %c0_i32, %c0_i32_0 : i32, i32
  }
  func.func @transform_2(%arg0: i32) -> (i32, i32) {
    %c0_i32 = arith.constant 0 : i32
    %c0_i32_0 = arith.constant 0 : i32
    %c0_i32_1 = arith.constant 0 : i32
    return %c0_i32, %c0_i32_0 : i32, i32
  }
  func.func @transform_3(%arg0: i32) -> (i32, i32) {
    %c0_i32 = arith.constant 0 : i32
    %c0_i32_0 = arith.constant 0 : i32
    %c0_i32_1 = arith.constant 0 : i32
    return %c0_i32, %c0_i32_0 : i32, i32
  }
  func.func @transform_4(%arg0: i32) -> (i32, i32) {
    %c0_i32 = arith.constant 0 : i32
    %c0_i32_0 = arith.constant 0 : i32
    %c0_i32_1 = arith.constant 0 : i32
    return %c0_i32, %c0_i32_0 : i32, i32
  }
  func.func @transform_5(%arg0: i32) -> (i32, i32) {
    %c0_i32 = arith.constant 0 : i32
    %c0_i32_0 = arith.constant 0 : i32
    return %arg0, %c0_i32 : i32, i32
  }
}

</mosaic_0001>

<llo_original>
// kernel: tpu_custom_call.1
$region0: #{tpu_custom_call.1}
  #allocation0 [shape = 'u32[]', space=smem, size = 0x4, offset = 0x4, fixed_abs, tag = 'smem constant byte address 0x4 - core index']
  #allocation1 [shape = 'u32[72,128]{1,0:T(1,128)}', space=vmem, size = 0x9000, scoped, tag = 'internal scratch']
  %s0 = inlined_call_operand.hbm [shape: f32[8,128], index: 0, kind: input, shape index: {}]
  %s1 = inlined_call_operand.hbm [shape: f32[128,128], index: 1, kind: input, shape index: {}]
  %s2 = inlined_call_operand.vmem [shape: f32[1,128], index: 2, kind: input, shape index: {}]
  %s3 = inlined_call_operand.hbm [shape: f32[128,128], index: 3, kind: input, shape index: {}]
  %s4 = inlined_call_operand.vmem [shape: f32[1,128], index: 4, kind: input, shape index: {}]
  %s5 = inlined_call_operand.hbm [shape: f32[8,128], index: 5, kind: output, shape index: {}]
  %s6 = sld [smem:[#allocation0]]
  $region42: #{tpu_custom_call.1} parent=0
    _
  %s8 = ssub.s32 1, %s6
  %s9 = scalar_select 0, %s8, %s6
  $region1: #{tpu_custom_call.1} parent=0
    #allocation2 [shape = 'u8[4096]{0}', space=vmem, size = 0x1000, scoped, tag = 'input window, operand 0, single buffered']
    #allocation3 [shape = 's32[1]{0}', space=sflag, size = 0x4, scoped, tag = 'scoped memory for tpu_custom_call.1']
    #allocation4 [shape = 's32[1]{0}', space=sflag, size = 0x4, scoped, tag = 'scoped memory for tpu_custom_call.1']
    #allocation5 [shape = 'u8[65536]{0}', space=vmem, size = 0x10000, scoped, tag = 'input window, operand 1, single buffered']
    #allocation6 [shape = 's32[1]{0}', space=sflag, size = 0x4, scoped, tag = 'scoped memory for tpu_custom_call.1']
    #allocation7 [shape = 'u8[65536]{0}', space=vmem, size = 0x10000, scoped, tag = 'input window, operand 3, single buffered']
    #allocation8 [shape = 'u8[4096]{0}', space=vmem, size = 0x1000, scoped, tag = 'output window, operand 0, single buffered']
    %10 = vsyncpa [#allocation3], 0
    %11 = vsyncpa [#allocation6], 0
    %12 = vsyncpa [#allocation4], 0
    // Predicated region
    $region2: #{tpu_custom_call.1} parent=1 // pred_check
      _
    $region3: #{tpu_custom_call.1} parent=1 // pred_check_branch
      %14 = sbr.rel (0) target = $region5
    $region4: #{tpu_custom_call.1} parent=1 // pred_region
      %16 = vsyncadd [#allocation3], 0
      %s18 = sshll.u32 %s0, 4
      %s19 = int_to_ptr.hbm [resolvable:$true] %s18
      %s20 = sshll.u32 [#allocation2], 4
      %s21 = int_to_ptr.vmem [resolvable:$true] %s20
      %23 = dma.hbm_to_vmem [thread:$0]  %s19, 128, %s21, [#allocation3]
    $region5: #{tpu_custom_call.1} parent=1 // pred_fallthru
      _
    // Predicated region
    $region6: #{tpu_custom_call.1} parent=1 // pred_check
      _
    $region7: #{tpu_custom_call.1} parent=1 // pred_check_branch
      %25 = sbr.rel (0) target = $region9
    $region8: #{tpu_custom_call.1} parent=1 // pred_region
      %27 = vsyncadd [#allocation6], 0
      %s28 = sshll.u32 %s1, 4
      %s29 = int_to_ptr.hbm [resolvable:$true] %s28
      %s30 = sshll.u32 [#allocation5], 4
      %s31 = int_to_ptr.vmem [resolvable:$true] %s30
      %36 = dma.hbm_to_vmem [thread:$0]  %s29, 2048, %s31, [#allocation6], 128, 128, 8
    $region9: #{tpu_custom_call.1} parent=1 // pred_fallthru
      _
    // Predicated region
    $region10: #{tpu_custom_call.1} parent=1 // pred_check
      _
    $region11: #{tpu_custom_call.1} parent=1 // pred_check_branch
      %38 = sbr.rel (0) target = $region13
    $region12: #{tpu_custom_call.1} parent=1 // pred_region
      _
    $region13: #{tpu_custom_call.1} parent=1 // pred_fallthru
      _
    // Predicated region
    $region14: #{tpu_custom_call.1} parent=1 // pred_check
      _
    $region15: #{tpu_custom_call.1} parent=1 // pred_check_branch
      %40 = sbr.rel (0) target = $region17
    $region16: #{tpu_custom_call.1} parent=1 // pred_region
      %42 = vsyncadd [#allocation6], 0
      %s43 = sshll.u32 %s3, 4
      %s44 = int_to_ptr.hbm [resolvable:$true] %s43
      %s45 = sshll.u32 [#allocation7], 4
      %s46 = int_to_ptr.vmem [resolvable:$true] %s45
      %51 = dma.hbm_to_vmem [thread:$0]  %s44, 2048, %s46, [#allocation6], 128, 128, 8
    $region17: #{tpu_custom_call.1} parent=1 // pred_fallthru
      _
    // Predicated region
    $region18: #{tpu_custom_call.1} parent=1 // pred_check
      _
    $region19: #{tpu_custom_call.1} parent=1 // pred_check_branch
      %53 = sbr.rel (0) target = $region21
    $region20: #{tpu_custom_call.1} parent=1 // pred_region
      _
    $region21: #{tpu_custom_call.1} parent=1 // pred_fallthru
      _
    // Predicated region
    $region22: #{tpu_custom_call.1} parent=1 // pred_check
      _
    $region23: #{tpu_custom_call.1} parent=1 // pred_check_branch
      %55 = sbr.rel (0) target = $region25
    $region24: #{tpu_custom_call.1} parent=1 // pred_region
      %57 = dma.done [#allocation3], 128
    $region25: #{tpu_custom_call.1} parent=1 // pred_fallthru
      _
    // Predicated region
    $region26: #{tpu_custom_call.1} parent=1 // pred_check
      _
    $region27: #{tpu_custom_call.1} parent=1 // pred_check_branch
      %59 = sbr.rel (0) target = $region29
    $region28: #{tpu_custom_call.1} parent=1 // pred_region
      %61 = dma.done [#allocation6], 2048
    $region29: #{tpu_custom_call.1} parent=1 // pred_fallthru
      _
    // Predicated region
    $region30: #{tpu_custom_call.1} parent=1 // pred_check
      _
    $region31: #{tpu_custom_call.1} parent=1 // pred_check_branch
      %63 = sbr.rel (0) target = $region33
    $region32: #{tpu_custom_call.1} parent=1 // pred_region
      %65 = dma.done [#allocation6], 2048
    $region33: #{tpu_custom_call.1} parent=1 // pred_fallthru
      _
    %v66 = vld [vmem:[#allocation2] sm:$0xff]
    %v67 = vld [vmem:[#allocation5] sm:$0xff]
    %v68 = vld [vmem:[#allocation5 + $0x8] sm:$0xff]
    %v69 = vld [vmem:[#allocation5 + $0x10] sm:$0xff]
    %v70 = vld [vmem:[#allocation5 + $0x18] sm:$0xff]
    %v71 = vld [vmem:[#allocation5 + $0x20] sm:$0xff]
    %v72 = vld [vmem:[#allocation5 + $0x28] sm:$0xff]
    %v73 = vld [vmem:[#allocation5 + $0x30] sm:$0xff]
    %v74 = vld [vmem:[#allocation5 + $0x38] sm:$0xff]
    %v75 = vld [vmem:[#allocation5 + $0x40] sm:$0xff]
    %v76 = vld [vmem:[#allocation5 + $0x48] sm:$0xff]
    %v77 = vld [vmem:[#allocation5 + $0x50] sm:$0xff]
    %v78 = vld [vmem:[#allocation5 + $0x58] sm:$0xff]
    %v79 = vld [vmem:[#allocation5 + $0x60] sm:$0xff]
    %v80 = vld [vmem:[#allocation5 + $0x68] sm:$0xff]
    %v81 = vld [vmem:[#allocation5 + $0x70] sm:$0xff]
    %v82 = vld [vmem:[#allocation5 + $0x78] sm:$0xff]
    %v83 = vld [vmem:[%s2] sm:$0x1]
    %v85 = vperm.slane %v83, 0
    %87 = vmatpush.msra.mxu0 %v82
    %88 = vmatpush.msra.mxu0 %v81
    %89 = vmatpush.msra.mxu0 %v80
    %90 = vmatpush.msra.mxu0 %v79
    %91 = vmatpush.msra.mxu0 %v78
    %92 = vmatpush.msra.mxu0 %v77
    %93 = vmatpush.msra.mxu0 %v76
    %94 = vmatpush.msra.mxu0 %v75
    %95 = vmatpush.msra.mxu0 %v74
    %96 = vmatpush.msra.mxu0 %v73
    %97 = vmatpush.msra.mxu0 %v72
    %98 = vmatpush.msra.mxu0 %v71
    %99 = vmatpush.msra.mxu0 %v70
    %100 = vmatpush.msra.mxu0 %v69
    %101 = vmatpush.msra.mxu0 %v68
    %102 = vmatpush.msra.mxu0 %v67
    %103 = vmatmul.f32.gmra.mxu0 %v66
    %v104 = vpop.f32.mrf.mxu0
    %v105 = vadd.f32 %v85, %v104
    %106 = vdwg.mxu0
    %v107 = vxor.u32 %v105, 2147483648
    %v108 = vmul.f32 %v107, 1.442695
    %v109 = vpow.pop %v108
    %v110 = vadd.f32 %v109, 1.0
    %v111 = vrcp.pop %v110
    %v112 = vmul.f32 %v110, %v111
    %v113 = vsub.f32 1.0, %v112
    %v114 = vmul.f32 %v111, %v113
    %v115 = vadd.f32 %v111, %v114
    %vm116 = vweird.f32 %v110
    %vm117 = vweird.f32 %v111
    %vm118 = vmor %vm116, %vm117
    %v119 = vsel %vm118, %v111, %v115
    %v120 = vand.u32 2147483647, %v110
    %vm121 = vcmp.eq.f32.partialorder %v120, 8.507059e+37
    %v122 = vand.u32 %v110, 2147483648
    %v123 = vor.u32 1.1754944e-38, %v122
    %v124 = vsel %vm121, %v123, %v119
    %v125 = vmul.f32 1.0, %v124
    %v126 = vmul.f32 %v105, %v125
    %v127 = vld [vmem:[#allocation7] sm:$0xff]
    %v128 = vld [vmem:[#allocation7 + $0x8] sm:$0xff]
    %v129 = vld [vmem:[#allocation7 + $0x10] sm:$0xff]
    %v130 = vld [vmem:[#allocation7 + $0x18] sm:$0xff]
    %v131 = vld [vmem:[#allocation7 + $0x20] sm:$0xff]
    %v132 = vld [vmem:[#allocation7 + $0x28] sm:$0xff]
    %v133 = vld [vmem:[#allocation7 + $0x30] sm:$0xff]
    %v134 = vld [vmem:[#allocation7 + $0x38] sm:$0xff]
    %v135 = vld [vmem:[#allocation7 + $0x40] sm:$0xff]
    %v136 = vld [vmem:[#allocation7 + $0x48] sm:$0xff]
    %v137 = vld [vmem:[#allocation7 + $0x50] sm:$0xff]
    %v138 = vld [vmem:[#allocation7 + $0x58] sm:$0xff]
    %v139 = vld [vmem:[#allocation7 + $0x60] sm:$0xff]
    %v140 = vld [vmem:[#allocation7 + $0x68] sm:$0xff]
    %v141 = vld [vmem:[#allocation7 + $0x70] sm:$0xff]
    %v142 = vld [vmem:[#allocation7 + $0x78] sm:$0xff]
    %v143 = vld [vmem:[%s4] sm:$0x1]
    %v145 = vperm.slane %v143, 0
    %147 = vmatpush.msra.mxu0 %v142
    %148 = vmatpush.msra.mxu0 %v141
    %149 = vmatpush.msra.mxu0 %v140
    %150 = vmatpush.msra.mxu0 %v139
    %151 = vmatpush.msra.mxu0 %v138
    %152 = vmatpush.msra.mxu0 %v137
    %153 = vmatpush.msra.mxu0 %v136
    %154 = vmatpush.msra.mxu0 %v135
    %155 = vmatpush.msra.mxu0 %v134
    %156 = vmatpush.msra.mxu0 %v133
    %157 = vmatpush.msra.mxu0 %v132
    %158 = vmatpush.msra.mxu0 %v131
    %159 = vmatpush.msra.mxu0 %v130
    %160 = vmatpush.msra.mxu0 %v129
    %161 = vmatpush.msra.mxu0 %v128
    %162 = vmatpush.msra.mxu0 %v127
    %163 = vmatmul.f32.gmra.mxu0 %v126
    %v164 = vpop.f32.mrf.mxu0
    %v165 = vadd.f32 %v145, %v164
    %166 = vdwg.mxu0
    %167 = vst [vmem:[#allocation8] sm:$0xff] %v165
    // Predicated region
    $region34: #{tpu_custom_call.1} parent=1 // pred_check
      _
    $region35: #{tpu_custom_call.1} parent=1 // pred_check_branch
      %169 = sbr.rel (0) target = $region37
    $region36: #{tpu_custom_call.1} parent=1 // pred_region
      %171 = vsyncadd [#allocation4], 0
      %s173 = sshll.u32 [#allocation8], 4
      %s174 = int_to_ptr.vmem [resolvable:$true] %s173
      %s175 = sshll.u32 %s5, 4
      %s176 = int_to_ptr.hbm [resolvable:$true] %s175
      %178 = dma.vmem_to_hbm [thread:$0]  %s174, 128, %s176, [#allocation4]
    $region37: #{tpu_custom_call.1} parent=1 // pred_fallthru
      _
    // Predicated region
    $region38: #{tpu_custom_call.1} parent=1 // pred_check
      _
    $region39: #{tpu_custom_call.1} parent=1 // pred_check_branch
      %180 = sbr.rel (0) target = $region41
    $region40: #{tpu_custom_call.1} parent=1 // pred_region
      %182 = dma.done [#allocation4], 128
    $region41: #{tpu_custom_call.1} parent=1 // pred_fallthru
      _
    %183 = vsyncpa [#allocation3], 1
    %184 = vsyncpa [#allocation6], 1
    %185 = vsyncpa [#allocation4], 1

</llo_original>
